<compile_context>
chip_gen: v5e
topology: v5e:2x2
jax: 0.10.0
libtpu: 0.0.40
codegen_flags: <defaults>
</compile_context>

<pallas_src>
import functools

import jax
import jax.numpy as jnp
from jax.experimental import pallas as pl
from jax.experimental.pallas import tpu as pltpu


def embedding_kernel(idx_ref, table_ref, o_ref):
    """One grid step: gather `tq` embedding rows via a one-hot MXU matmul.

    idx_ref   : (n_pad, 1) int32  ALL token indices, VMEM-resident
    table_ref : (num, D)   f32    full embedding table, VMEM-resident
    o_ref     : (tq, D)    f32    lane-dense output slab for this token tile
    """
    num = table_ref.shape[0]
    tq = o_ref.shape[0]

    # Slice this tile's indices out of the resident index vector (no per-step
    # DMA).  Start is tq-aligned -> aligned sublane dynamic slice.
    start = pl.multiple_of(pl.program_id(0) * tq, tq)
    idx = idx_ref[pl.ds(start, tq), :]                              # (tq, 1)

    # Clamp untrusted indices (PyTorch nn.Embedding would raise; we clamp so no
    # garbage rows can be produced).
    idx = jnp.clip(idx, 0, num - 1)

    # one_hot[i, j] = (idx[i] == j); lane-broadcast compare against a 2-D iota.
    col = jax.lax.broadcasted_iota(jnp.int32, (tq, num), 1)         # (tq, num)
    one_hot = (idx == col).astype(table_ref.dtype)                  # (tq, num)

    # Gather = one_hot @ table on the MXU.  HIGHEST precision keeps the f32
    # table values bit-faithful (no bf16 truncation of the "gathered" rows).
    o_ref[...] = jnp.dot(
        one_hot,
        table_ref[...],
        preferred_element_type=jnp.float32,
        precision=jax.lax.Precision.HIGHEST,
    ).astype(o_ref.dtype)


@functools.partial(jax.jit, static_argnames=("tokens_per_tile",))
def embedding_lookup(idx, table, *, tokens_per_tile=512):
    """Pallas equivalent of torch.nn.Embedding(num, D)(idx)."""
    num, D = table.shape
    flat = idx.reshape(-1).astype(jnp.int32)
    N = flat.shape[0]

    # Token-tile size: one tile (rounded to full sublanes) for small N,
    # otherwise 512 (multiple of 256 -> MXU-M aligned on v6e/v7x).
    if N <= tokens_per_tile:
        tq = max(8, ((N + 7) // 8) * 8)
    else:
        tq = tokens_per_tile

    n_pad = ((N + tq - 1) // tq) * tq
    if n_pad != N:
        flat = jnp.pad(flat, (0, n_pad - N))        # pad with index 0 (valid row)
    idx_2d = flat.reshape(n_pad, 1)
    n_tiles = n_pad // tq

    # Explicit VMEM budget: resident table (single copy) + resident idx +
    # double-buffered f32 output tiles + one-hot temp + headroom.  Clamped to
    # 16 MiB, comfortably under the 32 MiB default scoped limit on every
    # generation (v5e/v6e 128 MiB, v7x 64 MiB physical VMEM per core).
    itemsize = jnp.dtype(table.dtype).itemsize
    vmem_bytes = (
        itemsize * num * D            # embedding table
        + 4 * n_pad                   # index vector
        + 2 * 4 * tq * D              # double-buffered output tiles (f32)
        + 2 * 4 * tq * num            # one-hot temporary
        + (4 << 20)                   # headroom for regalloc / internal scratch
    )
    vmem_bytes = max(int(vmem_bytes), 16 << 20)

    out_flat = pl.pallas_call(
        embedding_kernel,
        out_shape=jax.ShapeDtypeStruct((n_pad, D), table.dtype),
        grid=(n_tiles,),
        in_specs=[
            # Whole index vector, VMEM-resident, single buffer (no per-step DMA).
            pl.BlockSpec(memory_space=pltpu.MemorySpace.VMEM),
            # Whole embedding table, VMEM-resident, single buffer.
            pl.BlockSpec(memory_space=pltpu.MemorySpace.VMEM),
        ],
        # Only the output is pipelined: lane-dense (tq, 128) slabs.
        out_specs=pl.BlockSpec((tq, D), lambda i: (i, 0)),
        compiler_params=pltpu.CompilerParams(
            dimension_semantics=("parallel",),      # megacore-shardable on v7x
            vmem_limit_bytes=vmem_bytes,
        ),
    )(idx_2d, table)

    return out_flat[:N].reshape(idx.shape + (D,))


if __name__ == "__main__":
    # EmbeddingModel(num=64, embedding_dim=128), idx of shape (batch=2, seq=8).
    num = 64
    embedding_dim = 128
    batch, seq = 2, 8

    key = jax.random.PRNGKey(0)
    k_table, k_idx = jax.random.split(key)

    # nn.Embedding initializes weights ~ N(0, 1); reproduce deterministically.
    table = jax.random.normal(k_table, (num, embedding_dim), dtype=jnp.float32)
    idx = jax.random.randint(k_idx, (batch, seq), 0, num, dtype=jnp.int32)

    out = embedding_lookup(idx, table)
    out = jax.block_until_ready(out)

    # Reference semantics check (pure JAX gather == torch embedding lookup).
    ref = table[idx]
    assert out.shape == (batch, seq, embedding_dim)
    assert out.dtype == jnp.float32
    assert jnp.allclose(out, ref), "Pallas embedding mismatch vs reference"

    print("KERNEL_OK")
</pallas_src>

<mosaic_0001>
module attributes {stable_mosaic.version = 11 : i64} {
  func.func @embedding_kernel(%arg0: i32, %arg1: memref<16x1xi32, #tpu.memory_space<vmem>>, %arg2: memref<64x128xf32, #tpu.memory_space<vmem>>, %arg3: memref<16x128xf32, #tpu.memory_space<vmem>>) attributes {dimension_semantics = [#tpu.dimension_semantics<parallel>], iteration_bounds = array<i64: 1>, scalar_prefetch = 0 : i64, scratch_operands = 0 : i64, tpu.core_type = #tpu.core_type<tc>, window_params = [{pipeline_mode = #tpu.pipeline_mode<synchronous>, transform_indices = @transform_0, window_bounds = array<i64: 16, 1>}, {pipeline_mode = #tpu.pipeline_mode<synchronous>, transform_indices = @transform_1, window_bounds = array<i64: 64, 128>}, {transform_indices = @transform_2, window_bounds = array<i64: 16, 128>}]} {
    %c16_i32 = arith.constant 16 : i32
    %0 = arith.muli %arg0, %c16_i32 : i32
    %1 = tpu.assume_multiple %0, 16 : i32
    %2 = arith.index_cast %1 : i32 to index
    %c0 = arith.constant 0 : index
    %3 = vector.load %arg1[%2, %c0] : memref<16x1xi32, #tpu.memory_space<vmem>>, vector<16x1xi32>
    %c0_i32 = arith.constant 0 : i32
    %c63_i32 = arith.constant 63 : i32
    %4 = vector.broadcast %c0_i32 : i32 to vector<16x1xi32>
    %5 = arith.maxsi %4, %3 : vector<16x1xi32>
    %6 = vector.broadcast %c63_i32 : i32 to vector<16x1xi32>
    %7 = arith.minsi %6, %5 : vector<16x1xi32>
    %8 = tpu.iota {dimensions = array<i32: 1>} : vector<16x64xi32>
    %9 = vector.broadcast %7 : vector<16x1xi32> to vector<16x64xi32>
    %10 = arith.cmpi eq, %9, %8 : vector<16x64xi32>
    %11 = arith.extui %10 : vector<16x64xi1> to vector<16x64xi32>
    %12 = arith.sitofp %11 : vector<16x64xi32> to vector<16x64xf32>
    %c0_0 = arith.constant 0 : index
    %c0_1 = arith.constant 0 : index
    %13 = vector.load %arg2[%c0_0, %c0_1] : memref<64x128xf32, #tpu.memory_space<vmem>>, vector<64x128xf32>
    %cst = arith.constant dense<0.000000e+00> : vector<16x128xf32>
    %14 = tpu.matmul %12, %13, %cst {dimension_numbers = #tpu.dot_dimension_numbers<[1], [0], [0], [1], [0, 0, 1, 1], [], []>, precision = #tpu.contract_precision<fp32>} : vector<16x64xf32>, vector<64x128xf32>, vector<16x128xf32> -> vector<16x128xf32>
    %c0_2 = arith.constant 0 : index
    %c0_3 = arith.constant 0 : index
    %15 = vector.load %arg3[%c0_2, %c0_3] : memref<16x128xf32, #tpu.memory_space<vmem>>, vector<16x128xf32>
    tpu.vector_store %arg3[%c0_2, %c0_3], %14 {strides = array<i32>} : memref<16x128xf32, #tpu.memory_space<vmem>>, vector<16x128xf32>,
    return
  }
  func.func @transform_0(%arg0: i32) -> (i32, i32) {
    %c0_i32 = arith.constant 0 : i32
    %c0_i32_0 = arith.constant 0 : i32
    %c0_i32_1 = arith.constant 0 : i32
    return %c0_i32, %c0_i32_0 : i32, i32
  }
  func.func @transform_1(%arg0: i32) -> (i32, i32) {
    %c0_i32 = arith.constant 0 : i32
    %c0_i32_0 = arith.constant 0 : i32
    %c0_i32_1 = arith.constant 0 : i32
    return %c0_i32, %c0_i32_0 : i32, i32
  }
  func.func @transform_2(%arg0: i32) -> (i32, i32) {
    %c0_i32 = arith.constant 0 : i32
    %c0_i32_0 = arith.constant 0 : i32
    return %arg0, %c0_i32 : i32, i32
  }
}

</mosaic_0001>

<llo_original>
// kernel: embedding_lookup.1
$region0: #{embedding_lookup.1}
  #allocation0 [shape = 'u32[]', space=smem, size = 0x4, offset = 0x4, fixed_abs, tag = 'smem constant byte address 0x4 - core index']
  #allocation1 [shape = 'u32[72,128]{1,0:T(1,128)}', space=vmem, size = 0x9000, scoped, tag = 'internal scratch']
  %s0 = inlined_call_operand.vmem [shape: s32[16,1], index: 0, kind: input, shape index: {}]
  %s1 = inlined_call_operand.hbm [shape: f32[64,128], index: 1, kind: input, shape index: {}]
  %s2 = inlined_call_operand.hbm [shape: f32[16,128], index: 2, kind: output, shape index: {}]
  %s3 = sld [smem:[#allocation0]]
  $region22: #{embedding_lookup.1} parent=0
    _
  %s5 = ssub.s32 1, %s3
  %s6 = scalar_select 0, %s5, %s3
  $region1: #{embedding_lookup.1} parent=0
    #allocation2 [shape = 'u8[32768]{0}', space=vmem, size = 0x8000, scoped, tag = 'input window, operand 1, single buffered']
    #allocation3 [shape = 's32[1]{0}', space=sflag, size = 0x4, scoped, tag = 'scoped memory for embedding_lookup.1']
    #allocation4 [shape = 's32[1]{0}', space=sflag, size = 0x4, scoped, tag = 'scoped memory for embedding_lookup.1']
    #allocation5 [shape = 'u8[8192]{0}', space=vmem, size = 0x2000, scoped, tag = 'output window, operand 0, single buffered']
    %7 = vsyncpa [#allocation3], 0
    %8 = vsyncpa [#allocation4], 0
    // Predicated region
    $region2: #{embedding_lookup.1} parent=1 // pred_check
      _
    $region3: #{embedding_lookup.1} parent=1 // pred_check_branch
      %10 = sbr.rel (0) target = $region5
    $region4: #{embedding_lookup.1} parent=1 // pred_region
      _
    $region5: #{embedding_lookup.1} parent=1 // pred_fallthru
      _
    // Predicated region
    $region6: #{embedding_lookup.1} parent=1 // pred_check
      _
    $region7: #{embedding_lookup.1} parent=1 // pred_check_branch
      %12 = sbr.rel (0) target = $region9
    $region8: #{embedding_lookup.1} parent=1 // pred_region
      %14 = vsyncadd [#allocation3], 0
      %s15 = sshll.u32 %s1, 4
      %s16 = int_to_ptr.hbm [resolvable:$true] %s15
      %s17 = sshll.u32 [#allocation2], 4
      %s18 = int_to_ptr.vmem [resolvable:$true] %s17
      %23 = dma.hbm_to_vmem [thread:$0]  %s16, 1024, %s18, [#allocation3], 128, 128, 8
    $region9: #{embedding_lookup.1} parent=1 // pred_fallthru
      _
    // Predicated region
    $region10: #{embedding_lookup.1} parent=1 // pred_check
      _
    $region11: #{embedding_lookup.1} parent=1 // pred_check_branch
      %25 = sbr.rel (0) target = $region13
    $region12: #{embedding_lookup.1} parent=1 // pred_region
      %27 = dma.done [#allocation3], 1024
    $region13: #{embedding_lookup.1} parent=1 // pred_fallthru
      _
    %s28 = smul.u32 0, 16
    %s29 = scalar_lea.vmem %s0, %s28
    %v30 = vld [vmem:[%s29] sm:$0xff]
    %v31 = vld [vmem:[%s29 + $0x8] sm:$0xff]
    %vm32 = vcmp.gt.s32.totalorder %v30, 0
    %v33 = vsel %vm32, %v30, 0
    %vm34 = vcmp.gt.s32.totalorder %v31, 0
    %v35 = vsel %vm34, %v31, 0
    %vm36 = vcmp.lt.s32.totalorder %v33, 63
    %v37 = vsel %vm36, %v33, 63
    %vm38 = vcmp.lt.s32.totalorder %v35, 63
    %v39 = vsel %vm38, %v35, 63
    %v40 = vlaneseq
    %v41 = vand.u32 %v40, 127
    %42 = vset.pattern.permute.xlu0 0
    %43 = vperm.xlu0 %42, %v37
    %v44 = vpop.permute.xlu0 %43
    %45 = vset.pattern.permute.xlu0 0
    %46 = vperm.xlu0 %45, %v39
    %v47 = vpop.permute.xlu0 %46
    %vm48 = vcmp.eq.s32.totalorder %v44, %v41
    %vm49 = vcmp.eq.s32.totalorder %v47, %v41
    %v50 = vsel %vm48, 1, 0
    %v51 = vsel %vm49, 1, 0
    %v52 = vcvt.s32.f32 %v50
    %v53 = vcvt.s32.f32 %v51
    %v54 = vld [vmem:[#allocation2] sm:$0xff]
    %v55 = vld [vmem:[#allocation2 + $0x8] sm:$0xff]
    %v56 = vld [vmem:[#allocation2 + $0x10] sm:$0xff]
    %v57 = vld [vmem:[#allocation2 + $0x18] sm:$0xff]
    %v58 = vld [vmem:[#allocation2 + $0x20] sm:$0xff]
    %v59 = vld [vmem:[#allocation2 + $0x28] sm:$0xff]
    %v60 = vld [vmem:[#allocation2 + $0x30] sm:$0xff]
    %v61 = vld [vmem:[#allocation2 + $0x38] sm:$0xff]
    %vm62 = vcmask 523264
    %v64 = vsel %vm62, %v52, 0
    %v67 = vsel %vm62, %v53, 0
    %69 = vmatpush.msra.mxu0 0.0
    %70 = vmatpush.msra.mxu0 0.0
    %71 = vmatpush.msra.mxu0 0.0
    %72 = vmatpush.msra.mxu0 0.0
    %73 = vmatpush.msra.mxu0 0.0
    %74 = vmatpush.msra.mxu0 0.0
    %75 = vmatpush.msra.mxu0 0.0
    %76 = vmatpush.msra.mxu0 0.0
    %v77 = vand.u32 %v61, 4294901760
    %78 = vmatpush.msra.mxu0 %v77
    %v79 = vand.u32 %v60, 4294901760
    %80 = vmatpush.msra.mxu0 %v79
    %v81 = vand.u32 %v59, 4294901760
    %82 = vmatpush.msra.mxu0 %v81
    %v83 = vand.u32 %v58, 4294901760
    %84 = vmatpush.msra.mxu0 %v83
    %v85 = vand.u32 %v57, 4294901760
    %86 = vmatpush.msra.mxu0 %v85
    %v87 = vand.u32 %v56, 4294901760
    %88 = vmatpush.msra.mxu0 %v87
    %v89 = vand.u32 %v55, 4294901760
    %90 = vmatpush.msra.mxu0 %v89
    %v91 = vand.u32 %v54, 4294901760
    %92 = vmatpush.msra.mxu0 %v91
    %v93 = vand.u32 %v64, 4294901760
    %v94 = vsub.f32 %v64, %v93
    %v95 = vand.u32 %v94, 4294901760
    %v96 = vsub.f32 %v94, %v95
    %v97 = vand.u32 %v96, 4294901760
    %98 = vmatmul.f32.gmra.mxu0 %v97
    %v99 = vpop.f32.mrf.mxu0
    %v100 = vadd.f32 0.0, %v99
    %v101 = vand.u32 %v67, 4294901760
    %v102 = vsub.f32 %v67, %v101
    %v103 = vand.u32 %v102, 4294901760
    %v104 = vsub.f32 %v102, %v103
    %v105 = vand.u32 %v104, 4294901760
    %106 = vmatmul.f32.gmra.mxu0 %v105
    %v107 = vpop.f32.mrf.mxu0
    %v108 = vadd.f32 0.0, %v107
    %109 = vdwg.mxu0
    %110 = vmatpush.msra.mxu0 0.0
    %111 = vmatpush.msra.mxu0 0.0
    %112 = vmatpush.msra.mxu0 0.0
    %113 = vmatpush.msra.mxu0 0.0
    %114 = vmatpush.msra.mxu0 0.0
    %115 = vmatpush.msra.mxu0 0.0
    %116 = vmatpush.msra.mxu0 0.0
    %117 = vmatpush.msra.mxu0 0.0
    %v118 = vand.u32 %v61, 4294901760
    %v119 = vsub.f32 %v61, %v118
    %v120 = vand.u32 %v119, 4294901760
    %v121 = vsub.f32 %v119, %v120
    %v122 = vand.u32 %v121, 4294901760
    %123 = vmatpush.msra.mxu0 %v122
    %v124 = vand.u32 %v60, 4294901760
    %v125 = vsub.f32 %v60, %v124
    %v126 = vand.u32 %v125, 4294901760
    %v127 = vsub.f32 %v125, %v126
    %v128 = vand.u32 %v127, 4294901760
    %129 = vmatpush.msra.mxu0 %v128
    %v130 = vand.u32 %v59, 4294901760
    %v131 = vsub.f32 %v59, %v130
    %v132 = vand.u32 %v131, 4294901760
    %v133 = vsub.f32 %v131, %v132
    %v134 = vand.u32 %v133, 4294901760
    %135 = vmatpush.msra.mxu0 %v134
    %v136 = vand.u32 %v58, 4294901760
    %v137 = vsub.f32 %v58, %v136
    %v138 = vand.u32 %v137, 4294901760
    %v139 = vsub.f32 %v137, %v138
    %v140 = vand.u32 %v139, 4294901760
    %141 = vmatpush.msra.mxu0 %v140
    %v142 = vand.u32 %v57, 4294901760
    %v143 = vsub.f32 %v57, %v142
    %v144 = vand.u32 %v143, 4294901760
    %v145 = vsub.f32 %v143, %v144
    %v146 = vand.u32 %v145, 4294901760
    %147 = vmatpush.msra.mxu0 %v146
    %v148 = vand.u32 %v56, 4294901760
    %v149 = vsub.f32 %v56, %v148
    %v150 = vand.u32 %v149, 4294901760
    %v151 = vsub.f32 %v149, %v150
    %v152 = vand.u32 %v151, 4294901760
    %153 = vmatpush.msra.mxu0 %v152
    %v154 = vand.u32 %v55, 4294901760
    %v155 = vsub.f32 %v55, %v154
    %v156 = vand.u32 %v155, 4294901760
    %v157 = vsub.f32 %v155, %v156
    %v158 = vand.u32 %v157, 4294901760
    %159 = vmatpush.msra.mxu0 %v158
    %v160 = vand.u32 %v54, 4294901760
    %v161 = vsub.f32 %v54, %v160
    %v162 = vand.u32 %v161, 4294901760
    %v163 = vsub.f32 %v161, %v162
    %v164 = vand.u32 %v163, 4294901760
    %165 = vmatpush.msra.mxu0 %v164
    %v166 = vand.u32 %v64, 4294901760
    %167 = vmatmul.f32.gmra.mxu0 %v166
    %v168 = vpop.f32.mrf.mxu0
    %v169 = vadd.f32 %v100, %v168
    %v170 = vand.u32 %v67, 4294901760
    %171 = vmatmul.f32.gmra.mxu0 %v170
    %v172 = vpop.f32.mrf.mxu0
    %v173 = vadd.f32 %v108, %v172
    %174 = vdwg.mxu0
    %175 = vmatpush.msra.mxu0 0.0
    %176 = vmatpush.msra.mxu0 0.0
    %177 = vmatpush.msra.mxu0 0.0
    %178 = vmatpush.msra.mxu0 0.0
    %179 = vmatpush.msra.mxu0 0.0
    %180 = vmatpush.msra.mxu0 0.0
    %181 = vmatpush.msra.mxu0 0.0
    %182 = vmatpush.msra.mxu0 0.0
    %v183 = vand.u32 %v61, 4294901760
    %v184 = vsub.f32 %v61, %v183
    %185 = vmatpush.msra.mxu0 %v184
    %v186 = vand.u32 %v60, 4294901760
    %v187 = vsub.f32 %v60, %v186
    %188 = vmatpush.msra.mxu0 %v187
    %v189 = vand.u32 %v59, 4294901760
    %v190 = vsub.f32 %v59, %v189
    %191 = vmatpush.msra.mxu0 %v190
    %v192 = vand.u32 %v58, 4294901760
    %v193 = vsub.f32 %v58, %v192
    %194 = vmatpush.msra.mxu0 %v193
    %v195 = vand.u32 %v57, 4294901760
    %v196 = vsub.f32 %v57, %v195
    %197 = vmatpush.msra.mxu0 %v196
    %v198 = vand.u32 %v56, 4294901760
    %v199 = vsub.f32 %v56, %v198
    %200 = vmatpush.msra.mxu0 %v199
    %v201 = vand.u32 %v55, 4294901760
    %v202 = vsub.f32 %v55, %v201
    %203 = vmatpush.msra.mxu0 %v202
    %v204 = vand.u32 %v54, 4294901760
    %v205 = vsub.f32 %v54, %v204
    %206 = vmatpush.msra.mxu0 %v205
    %v207 = vand.u32 %v64, 4294901760
    %v208 = vsub.f32 %v64, %v207
    %209 = vmatmul.f32.gmra.mxu0 %v208
    %v210 = vpop.f32.mrf.mxu0
    %v211 = vadd.f32 %v169, %v210
    %v212 = vand.u32 %v67, 4294901760
    %v213 = vsub.f32 %v67, %v212
    %214 = vmatmul.f32.gmra.mxu0 %v213
    %v215 = vpop.f32.mrf.mxu0
    %v216 = vadd.f32 %v173, %v215
    %217 = vdwg.mxu0
    %218 = vmatpush.msra.mxu0 0.0
    %219 = vmatpush.msra.mxu0 0.0
    %220 = vmatpush.msra.mxu0 0.0
    %221 = vmatpush.msra.mxu0 0.0
    %222 = vmatpush.msra.mxu0 0.0
    %223 = vmatpush.msra.mxu0 0.0
    %224 = vmatpush.msra.mxu0 0.0
    %225 = vmatpush.msra.mxu0 0.0
    %v226 = vand.u32 %v61, 4294901760
    %227 = vmatpush.msra.mxu0 %v226
    %v228 = vand.u32 %v60, 4294901760
    %229 = vmatpush.msra.mxu0 %v228
    %v230 = vand.u32 %v59, 4294901760
    %231 = vmatpush.msra.mxu0 %v230
    %v232 = vand.u32 %v58, 4294901760
    %233 = vmatpush.msra.mxu0 %v232
    %v234 = vand.u32 %v57, 4294901760
    %235 = vmatpush.msra.mxu0 %v234
    %v236 = vand.u32 %v56, 4294901760
    %237 = vmatpush.msra.mxu0 %v236
    %v238 = vand.u32 %v55, 4294901760
    %239 = vmatpush.msra.mxu0 %v238
    %v240 = vand.u32 %v54, 4294901760
    %241 = vmatpush.msra.mxu0 %v240
    %v242 = vand.u32 %v64, 4294901760
    %v243 = vsub.f32 %v64, %v242
    %v244 = vand.u32 %v243, 4294901760
    %245 = vmatmul.f32.gmra.mxu0 %v244
    %v246 = vpop.f32.mrf.mxu0
    %v247 = vadd.f32 %v211, %v246
    %v248 = vand.u32 %v67, 4294901760
    %v249 = vsub.f32 %v67, %v248
    %v250 = vand.u32 %v249, 4294901760
    %251 = vmatmul.f32.gmra.mxu0 %v250
    %v252 = vpop.f32.mrf.mxu0
    %v253 = vadd.f32 %v216, %v252
    %254 = vdwg.mxu0
    %255 = vmatpush.msra.mxu0 0.0
    %256 = vmatpush.msra.mxu0 0.0
    %257 = vmatpush.msra.mxu0 0.0
    %258 = vmatpush.msra.mxu0 0.0
    %259 = vmatpush.msra.mxu0 0.0
    %260 = vmatpush.msra.mxu0 0.0
    %261 = vmatpush.msra.mxu0 0.0
    %262 = vmatpush.msra.mxu0 0.0
    %v263 = vand.u32 %v61, 4294901760
    %v264 = vsub.f32 %v61, %v263
    %v265 = vand.u32 %v264, 4294901760
    %266 = vmatpush.msra.mxu0 %v265
    %v267 = vand.u32 %v60, 4294901760
    %v268 = vsub.f32 %v60, %v267
    %v269 = vand.u32 %v268, 4294901760
    %270 = vmatpush.msra.mxu0 %v269
    %v271 = vand.u32 %v59, 4294901760
    %v272 = vsub.f32 %v59, %v271
    %v273 = vand.u32 %v272, 4294901760
    %274 = vmatpush.msra.mxu0 %v273
    %v275 = vand.u32 %v58, 4294901760
    %v276 = vsub.f32 %v58, %v275
    %v277 = vand.u32 %v276, 4294901760
    %278 = vmatpush.msra.mxu0 %v277
    %v279 = vand.u32 %v57, 4294901760
    %v280 = vsub.f32 %v57, %v279
    %v281 = vand.u32 %v280, 4294901760
    %282 = vmatpush.msra.mxu0 %v281
    %v283 = vand.u32 %v56, 4294901760
    %v284 = vsub.f32 %v56, %v283
    %v285 = vand.u32 %v284, 4294901760
    %286 = vmatpush.msra.mxu0 %v285
    %v287 = vand.u32 %v55, 4294901760
    %v288 = vsub.f32 %v55, %v287
    %v289 = vand.u32 %v288, 4294901760
    %290 = vmatpush.msra.mxu0 %v289
    %v291 = vand.u32 %v54, 4294901760
    %v292 = vsub.f32 %v54, %v291
    %v293 = vand.u32 %v292, 4294901760
    %294 = vmatpush.msra.mxu0 %v293
    %v295 = vand.u32 %v64, 4294901760
    %296 = vmatmul.f32.gmra.mxu0 %v295
    %v297 = vpop.f32.mrf.mxu0
    %v298 = vadd.f32 %v247, %v297
    %v299 = vand.u32 %v67, 4294901760
    %300 = vmatmul.f32.gmra.mxu0 %v299
    %v301 = vpop.f32.mrf.mxu0
    %v302 = vadd.f32 %v253, %v301
    %303 = vdwg.mxu0
    %304 = vmatpush.msra.mxu0 0.0
    %305 = vmatpush.msra.mxu0 0.0
    %306 = vmatpush.msra.mxu0 0.0
    %307 = vmatpush.msra.mxu0 0.0
    %308 = vmatpush.msra.mxu0 0.0
    %309 = vmatpush.msra.mxu0 0.0
    %310 = vmatpush.msra.mxu0 0.0
    %311 = vmatpush.msra.mxu0 0.0
    %v312 = vand.u32 %v61, 4294901760
    %313 = vmatpush.msra.mxu0 %v312
    %v314 = vand.u32 %v60, 4294901760
    %315 = vmatpush.msra.mxu0 %v314
    %v316 = vand.u32 %v59, 4294901760
    %317 = vmatpush.msra.mxu0 %v316
    %v318 = vand.u32 %v58, 4294901760
    %319 = vmatpush.msra.mxu0 %v318
    %v320 = vand.u32 %v57, 4294901760
    %321 = vmatpush.msra.mxu0 %v320
    %v322 = vand.u32 %v56, 4294901760
    %323 = vmatpush.msra.mxu0 %v322
    %v324 = vand.u32 %v55, 4294901760
    %325 = vmatpush.msra.mxu0 %v324
    %v326 = vand.u32 %v54, 4294901760
    %327 = vmatpush.msra.mxu0 %v326
    %v328 = vand.u32 %v64, 4294901760
    %329 = vmatmul.f32.gmra.mxu0 %v328
    %v330 = vpop.f32.mrf.mxu0
    %v331 = vadd.f32 %v298, %v330
    %v332 = vand.u32 %v67, 4294901760
    %333 = vmatmul.f32.gmra.mxu0 %v332
    %v334 = vpop.f32.mrf.mxu0
    %v335 = vadd.f32 %v302, %v334
    %336 = vdwg.mxu0
    %337 = vst [vmem:[#allocation5] sm:$0xff] %v331
    %338 = vst [vmem:[#allocation5 + $0x8] sm:$0xff] %v335
    // Predicated region
    $region14: #{embedding_lookup.1} parent=1 // pred_check
      _
    $region15: #{embedding_lookup.1} parent=1 // pred_check_branch
      %340 = sbr.rel (0) target = $region17
    $region16: #{embedding_lookup.1} parent=1 // pred_region
      %342 = vsyncadd [#allocation4], 0
      %s343 = sshll.u32 [#allocation5], 4
      %s344 = int_to_ptr.vmem [resolvable:$true] %s343
      %s345 = sshll.u32 %s2, 4
      %s346 = int_to_ptr.hbm [resolvable:$true] %s345
      %351 = dma.vmem_to_hbm [thread:$0]  %s344, 256, %s346, [#allocation4], 128, 128, 8
    $region17: #{embedding_lookup.1} parent=1 // pred_fallthru
      _
    // Predicated region
    $region18: #{embedding_lookup.1} parent=1 // pred_check
      _
    $region19: #{embedding_lookup.1} parent=1 // pred_check_branch
      %353 = sbr.rel (0) target = $region21
    $region20: #{embedding_lookup.1} parent=1 // pred_region
      %355 = dma.done [#allocation4], 256
    $region21: #{embedding_lookup.1} parent=1 // pred_fallthru
      _
    %356 = vsyncpa [#allocation3], 1
    %357 = vsyncpa [#allocation4], 1

</llo_original>
